<compile_context>
chip_gen: v5e
topology: v5e:2x2
jax: 0.10.0
libtpu: 0.0.40
codegen_flags: <defaults>
</compile_context>

<pallas_src>
import functools
import math

import jax
import jax.numpy as jnp
from jax import lax
from jax.experimental import pallas as pl
from jax.experimental.pallas import tpu as pltpu


def _round_up(n, m):
    return ((n + m - 1) // m) * m


def _gating_kernel(x_ref, w_ref, b_ref, o_ref, *, precision):
    # x_ref: (TB, D)      batch tile, streamed per grid step (double-buffered)
    # w_ref: (D, E_pad)   pre-transposed weight, VMEM-resident across steps
    # b_ref: (1, E_pad)   bias, VMEM-resident
    # o_ref: (TB, E_pad)  lane-dense output tile (unmasked vst)
    acc = jnp.dot(
        x_ref[...],
        w_ref[...],
        preferred_element_type=jnp.float32,
        precision=precision,
    )
    o_ref[...] = (acc + b_ref[...].astype(jnp.float32)).astype(o_ref.dtype)


def _pick_row_tile(B, D, E_pad, x_itemsize, w_itemsize, block_b_cap):
    """Pick the batch row tile TB and the VMEM footprint it implies."""
    # Target ~4 MiB x tiles (measured streaming hits ~85% of HBM roofline well
    # before this; per-step overhead is ~0.35us so bigger is safe).
    target_tile_bytes = 4 * 1024 * 1024
    tb = _round_up(max(1, target_tile_bytes // max(1, D * x_itemsize)), 8)
    tb = min(tb, block_b_cap)
    tb = min(tb, _round_up(B, 8))
    tb = max(tb, 8)

    budget = 40 * 1024 * 1024  # keeps v7x's 64 MiB per-TC VMEM comfortable

    def vmem_bytes(t):
        return (2 * t * D * x_itemsize          # double-buffered x tiles
                + D * E_pad * w_itemsize        # resident weight
                + 128 * E_pad * 4               # resident bias (padded)
                + 2 * t * E_pad * x_itemsize)   # double-buffered out tiles

    while tb > 8 and vmem_bytes(tb) > budget:
        tb = max(8, _round_up(tb // 2, 8))
    return tb, vmem_bytes(tb)


@functools.partial(jax.jit, static_argnames=("block_b",))
def gating_network_forward(x, weight, bias, *, block_b=1024):
    """y = x @ weight.T + bias, matching torch.nn.Linear(input_dim, num_experts).

    x:      (batch, input_dim)
    weight: (num_experts, input_dim)   -- PyTorch layout
    bias:   (num_experts,)
    returns (batch, num_experts)
    """
    B, D = x.shape
    E = weight.shape[0]

    # Lane-dense expert axis: pad E up to a multiple of 128 with zero experts.
    E_pad = _round_up(E, 128)

    x_itemsize = x.dtype.itemsize
    w_itemsize = weight.dtype.itemsize
    TB, vmem_needed = _pick_row_tile(B, D, E_pad, x_itemsize, w_itemsize, block_b)

    # One-time weight prep: pad expert axis, transpose to (D, E_pad) so the
    # kernel's dot is a native (M,K)x(K,N) MXU op (no in-kernel transpose).
    w_p = weight
    b_p = bias
    if E_pad != E:
        w_p = jnp.pad(weight, ((0, E_pad - E), (0, 0)))
        b_p = jnp.pad(bias, ((0, E_pad - E),))
    w_t = jnp.transpose(w_p)            # (D, E_pad), lane-dense
    b2d = b_p.reshape(1, E_pad)

    # f32 nn.Linear parity needs the multi-pass f32 MXU algorithm; it hides
    # under the HBM-bound x stream. bf16/других inputs use default precision.
    precision = lax.Precision.HIGHEST if x.dtype == jnp.float32 else None

    grid = (pl.cdiv(B, TB),)            # ragged last block: no x padding needed

    vmem_limit = int(min(60 * 2**20, max(32 * 2**20, vmem_needed * 5 // 4)))

    out = pl.pallas_call(
        functools.partial(_gating_kernel, precision=precision),
        out_shape=jax.ShapeDtypeStruct((B, E_pad), x.dtype),
        grid_spec=pltpu.PrefetchScalarGridSpec(
            num_scalar_prefetch=0,
            grid=grid,
            in_specs=[
                pl.BlockSpec((TB, D), lambda i: (i, 0)),       # x: streamed rows
                pl.BlockSpec((D, E_pad), lambda i: (0, 0)),    # weight: resident
                pl.BlockSpec((1, E_pad), lambda i: (0, 0)),    # bias:   resident
            ],
            out_specs=pl.BlockSpec((TB, E_pad), lambda i: (i, 0)),
        ),
        compiler_params=pltpu.CompilerParams(
            dimension_semantics=("parallel",),   # megacore sharding on v7x
            vmem_limit_bytes=vmem_limit,
        ),
        cost_estimate=pl.CostEstimate(
            flops=2 * B * D * E_pad,
            bytes_accessed=(B * D * x_itemsize
                            + D * E_pad * w_itemsize
                            + B * E_pad * x_itemsize),
            transcendentals=0,
        ),
    )(x, w_t, b2d)

    return out[:, :E]


if __name__ == "__main__":
    input_dim = 32
    num_experts = 4
    batch = 8

    key = jax.random.PRNGKey(0)
    kx, kw, kb = jax.random.split(key, 3)

    x = jax.random.normal(kx, (batch, input_dim), dtype=jnp.float32)
    # Deterministic init mimicking nn.Linear's uniform(-1/sqrt(D), 1/sqrt(D))
    bound = 1.0 / math.sqrt(input_dim)
    weight = jax.random.uniform(kw, (num_experts, input_dim),
                                minval=-bound, maxval=bound, dtype=jnp.float32)
    bias = jax.random.uniform(kb, (num_experts,),
                              minval=-bound, maxval=bound, dtype=jnp.float32)

    out = gating_network_forward(x, weight, bias)
    out = jax.block_until_ready(out)

    # Pure-JAX reference check
    ref = x @ weight.T + bias
    assert out.shape == (batch, num_experts)
    assert jnp.allclose(out, ref, atol=1e-4, rtol=1e-4), "mismatch vs reference"

    print("KERNEL_OK")
</pallas_src>

<mosaic_0001>
module attributes {stable_mosaic.version = 11 : i64} {
  func.func @_gating_kernel(%arg0: i32, %arg1: memref<8x32xf32, #tpu.memory_space<vmem>>, %arg2: memref<32x128xf32, #tpu.memory_space<vmem>>, %arg3: memref<1x128xf32, #tpu.memory_space<vmem>>, %arg4: memref<8x128xf32, #tpu.memory_space<vmem>>) attributes {dimension_semantics = [#tpu.dimension_semantics<parallel>], iteration_bounds = array<i64: 1>, scalar_prefetch = 0 : i64, scratch_operands = 0 : i64, tpu.core_type = #tpu.core_type<tc>, window_params = [{transform_indices = @transform_0, window_bounds = array<i64: 8, 32>}, {pipeline_mode = #tpu.pipeline_mode<synchronous>, transform_indices = @transform_1, window_bounds = array<i64: 32, 128>}, {pipeline_mode = #tpu.pipeline_mode<synchronous>, transform_indices = @transform_2, window_bounds = array<i64: 1, 128>}, {transform_indices = @transform_3, window_bounds = array<i64: 8, 128>}]} {
    %c0 = arith.constant 0 : index
    %c0_0 = arith.constant 0 : index
    %0 = vector.load %arg1[%c0, %c0_0] : memref<8x32xf32, #tpu.memory_space<vmem>>, vector<8x32xf32>
    %c0_1 = arith.constant 0 : index
    %c0_2 = arith.constant 0 : index
    %1 = vector.load %arg2[%c0_1, %c0_2] : memref<32x128xf32, #tpu.memory_space<vmem>>, vector<32x128xf32>
    %cst = arith.constant dense<0.000000e+00> : vector<8x128xf32>
    %2 = tpu.matmul %0, %1, %cst {dimension_numbers = #tpu.dot_dimension_numbers<[1], [0], [0], [1], [0, 0, 1, 1], [], []>, precision = #tpu.contract_precision<fp32>} : vector<8x32xf32>, vector<32x128xf32>, vector<8x128xf32> -> vector<8x128xf32>
    %c0_3 = arith.constant 0 : index
    %c0_4 = arith.constant 0 : index
    %3 = vector.load %arg3[%c0_3, %c0_4] : memref<1x128xf32, #tpu.memory_space<vmem>>, vector<1x128xf32>
    %4 = vector.broadcast %3 : vector<1x128xf32> to vector<8x128xf32>
    %5 = arith.addf %2, %4 : vector<8x128xf32>
    %c0_5 = arith.constant 0 : index
    %c0_6 = arith.constant 0 : index
    %6 = vector.load %arg4[%c0_5, %c0_6] : memref<8x128xf32, #tpu.memory_space<vmem>>, vector<8x128xf32>
    tpu.vector_store %arg4[%c0_5, %c0_6], %5 {strides = array<i32>} : memref<8x128xf32, #tpu.memory_space<vmem>>, vector<8x128xf32>,
    return
  }
  func.func @transform_0(%arg0: i32) -> (i32, i32) {
    %c0_i32 = arith.constant 0 : i32
    %c0_i32_0 = arith.constant 0 : i32
    return %arg0, %c0_i32 : i32, i32
  }
  func.func @transform_1(%arg0: i32) -> (i32, i32) {
    %c0_i32 = arith.constant 0 : i32
    %c0_i32_0 = arith.constant 0 : i32
    %c0_i32_1 = arith.constant 0 : i32
    return %c0_i32, %c0_i32_0 : i32, i32
  }
  func.func @transform_2(%arg0: i32) -> (i32, i32) {
    %c0_i32 = arith.constant 0 : i32
    %c0_i32_0 = arith.constant 0 : i32
    %c0_i32_1 = arith.constant 0 : i32
    return %c0_i32, %c0_i32_0 : i32, i32
  }
  func.func @transform_3(%arg0: i32) -> (i32, i32) {
    %c0_i32 = arith.constant 0 : i32
    %c0_i32_0 = arith.constant 0 : i32
    return %arg0, %c0_i32 : i32, i32
  }
}

</mosaic_0001>

<llo_original>
// kernel: gating_network_forward.1
$region0: #{gating_network_forward.1}
  #allocation0 [shape = 'u32[]', space=smem, size = 0x4, offset = 0x4, fixed_abs, tag = 'smem constant byte address 0x4 - core index']
  #allocation1 [shape = 'u32[72,128]{1,0:T(1,128)}', space=vmem, size = 0x9000, scoped, tag = 'internal scratch']
  %s0 = inlined_call_operand.vmem [shape: f32[8,32], index: 0, kind: input, shape index: {}]
  %s1 = inlined_call_operand.vmem [shape: f32[32,128], index: 1, kind: input, shape index: {}]
  %s2 = inlined_call_operand.vmem [shape: f32[1,128], index: 2, kind: input, shape index: {}]
  %s3 = inlined_call_operand.vmem [shape: f32[8,128], index: 3, kind: output, shape index: {}]
  %s4 = sld [smem:[#allocation0]]
  $region22: #{gating_network_forward.1} parent=0
    _
  %s6 = ssub.s32 1, %s4
  %s7 = scalar_select 0, %s6, %s4
  // Predicated region
  $region2: #{gating_network_forward.1} parent=0 // pred_check
    _
  $region3: #{gating_network_forward.1} parent=0 // pred_check_branch
    %9 = sbr.rel (0) target = $region5
  $region4: #{gating_network_forward.1} parent=0 // pred_region
    _
  $region5: #{gating_network_forward.1} parent=0 // pred_fallthru
    _
  // Predicated region
  $region6: #{gating_network_forward.1} parent=0 // pred_check
    _
  $region7: #{gating_network_forward.1} parent=0 // pred_check_branch
    %11 = sbr.rel (0) target = $region9
  $region8: #{gating_network_forward.1} parent=0 // pred_region
    _
  $region9: #{gating_network_forward.1} parent=0 // pred_fallthru
    _
  // Predicated region
  $region10: #{gating_network_forward.1} parent=0 // pred_check
    _
  $region11: #{gating_network_forward.1} parent=0 // pred_check_branch
    %13 = sbr.rel (0) target = $region13
  $region12: #{gating_network_forward.1} parent=0 // pred_region
    _
  $region13: #{gating_network_forward.1} parent=0 // pred_fallthru
    _
  %v14 = vld [vmem:[%s0] sm:$0xff]
  %v15 = vld [vmem:[%s1] sm:$0xff]
  %v16 = vld [vmem:[%s1 + $0x8] sm:$0xff]
  %v17 = vld [vmem:[%s1 + $0x10] sm:$0xff]
  %v18 = vld [vmem:[%s1 + $0x18] sm:$0xff]
  %v19 = vld [vmem:[%s2] sm:$0x1]
  %v21 = vperm.slane %v19, 0
  %vm23 = vcmask 261120
  %v25 = vsel %vm23, %v14, 0
  %27 = vmatpush.msra.mxu0 0.0
  %28 = vmatpush.msra.mxu0 0.0
  %29 = vmatpush.msra.mxu0 0.0
  %30 = vmatpush.msra.mxu0 0.0
  %31 = vmatpush.msra.mxu0 0.0
  %32 = vmatpush.msra.mxu0 0.0
  %33 = vmatpush.msra.mxu0 0.0
  %34 = vmatpush.msra.mxu0 0.0
  %35 = vmatpush.msra.mxu0 0.0
  %36 = vmatpush.msra.mxu0 0.0
  %37 = vmatpush.msra.mxu0 0.0
  %38 = vmatpush.msra.mxu0 0.0
  %v39 = vand.u32 %v18, 4294901760
  %40 = vmatpush.msra.mxu0 %v39
  %v41 = vand.u32 %v17, 4294901760
  %42 = vmatpush.msra.mxu0 %v41
  %v43 = vand.u32 %v16, 4294901760
  %44 = vmatpush.msra.mxu0 %v43
  %v45 = vand.u32 %v15, 4294901760
  %46 = vmatpush.msra.mxu0 %v45
  %v47 = vand.u32 %v25, 4294901760
  %v48 = vsub.f32 %v25, %v47
  %v49 = vand.u32 %v48, 4294901760
  %v50 = vsub.f32 %v48, %v49
  %v51 = vand.u32 %v50, 4294901760
  %52 = vmatmul.f32.gmra.mxu0 %v51
  %v53 = vpop.f32.mrf.mxu0
  %v54 = vadd.f32 %v21, %v53
  %55 = vdwg.mxu0
  %56 = vmatpush.msra.mxu0 0.0
  %57 = vmatpush.msra.mxu0 0.0
  %58 = vmatpush.msra.mxu0 0.0
  %59 = vmatpush.msra.mxu0 0.0
  %60 = vmatpush.msra.mxu0 0.0
  %61 = vmatpush.msra.mxu0 0.0
  %62 = vmatpush.msra.mxu0 0.0
  %63 = vmatpush.msra.mxu0 0.0
  %64 = vmatpush.msra.mxu0 0.0
  %65 = vmatpush.msra.mxu0 0.0
  %66 = vmatpush.msra.mxu0 0.0
  %67 = vmatpush.msra.mxu0 0.0
  %v68 = vand.u32 %v18, 4294901760
  %v69 = vsub.f32 %v18, %v68
  %v70 = vand.u32 %v69, 4294901760
  %v71 = vsub.f32 %v69, %v70
  %v72 = vand.u32 %v71, 4294901760
  %73 = vmatpush.msra.mxu0 %v72
  %v74 = vand.u32 %v17, 4294901760
  %v75 = vsub.f32 %v17, %v74
  %v76 = vand.u32 %v75, 4294901760
  %v77 = vsub.f32 %v75, %v76
  %v78 = vand.u32 %v77, 4294901760
  %79 = vmatpush.msra.mxu0 %v78
  %v80 = vand.u32 %v16, 4294901760
  %v81 = vsub.f32 %v16, %v80
  %v82 = vand.u32 %v81, 4294901760
  %v83 = vsub.f32 %v81, %v82
  %v84 = vand.u32 %v83, 4294901760
  %85 = vmatpush.msra.mxu0 %v84
  %v86 = vand.u32 %v15, 4294901760
  %v87 = vsub.f32 %v15, %v86
  %v88 = vand.u32 %v87, 4294901760
  %v89 = vsub.f32 %v87, %v88
  %v90 = vand.u32 %v89, 4294901760
  %91 = vmatpush.msra.mxu0 %v90
  %v92 = vand.u32 %v25, 4294901760
  %93 = vmatmul.f32.gmra.mxu0 %v92
  %v94 = vpop.f32.mrf.mxu0
  %v95 = vadd.f32 %v54, %v94
  %96 = vdwg.mxu0
  %97 = vmatpush.msra.mxu0 0.0
  %98 = vmatpush.msra.mxu0 0.0
  %99 = vmatpush.msra.mxu0 0.0
  %100 = vmatpush.msra.mxu0 0.0
  %101 = vmatpush.msra.mxu0 0.0
  %102 = vmatpush.msra.mxu0 0.0
  %103 = vmatpush.msra.mxu0 0.0
  %104 = vmatpush.msra.mxu0 0.0
  %105 = vmatpush.msra.mxu0 0.0
  %106 = vmatpush.msra.mxu0 0.0
  %107 = vmatpush.msra.mxu0 0.0
  %108 = vmatpush.msra.mxu0 0.0
  %v109 = vand.u32 %v18, 4294901760
  %v110 = vsub.f32 %v18, %v109
  %111 = vmatpush.msra.mxu0 %v110
  %v112 = vand.u32 %v17, 4294901760
  %v113 = vsub.f32 %v17, %v112
  %114 = vmatpush.msra.mxu0 %v113
  %v115 = vand.u32 %v16, 4294901760
  %v116 = vsub.f32 %v16, %v115
  %117 = vmatpush.msra.mxu0 %v116
  %v118 = vand.u32 %v15, 4294901760
  %v119 = vsub.f32 %v15, %v118
  %120 = vmatpush.msra.mxu0 %v119
  %v121 = vand.u32 %v25, 4294901760
  %v122 = vsub.f32 %v25, %v121
  %123 = vmatmul.f32.gmra.mxu0 %v122
  %v124 = vpop.f32.mrf.mxu0
  %v125 = vadd.f32 %v95, %v124
  %126 = vdwg.mxu0
  %127 = vmatpush.msra.mxu0 0.0
  %128 = vmatpush.msra.mxu0 0.0
  %129 = vmatpush.msra.mxu0 0.0
  %130 = vmatpush.msra.mxu0 0.0
  %131 = vmatpush.msra.mxu0 0.0
  %132 = vmatpush.msra.mxu0 0.0
  %133 = vmatpush.msra.mxu0 0.0
  %134 = vmatpush.msra.mxu0 0.0
  %135 = vmatpush.msra.mxu0 0.0
  %136 = vmatpush.msra.mxu0 0.0
  %137 = vmatpush.msra.mxu0 0.0
  %138 = vmatpush.msra.mxu0 0.0
  %v139 = vand.u32 %v18, 4294901760
  %140 = vmatpush.msra.mxu0 %v139
  %v141 = vand.u32 %v17, 4294901760
  %142 = vmatpush.msra.mxu0 %v141
  %v143 = vand.u32 %v16, 4294901760
  %144 = vmatpush.msra.mxu0 %v143
  %v145 = vand.u32 %v15, 4294901760
  %146 = vmatpush.msra.mxu0 %v145
  %v147 = vand.u32 %v25, 4294901760
  %v148 = vsub.f32 %v25, %v147
  %v149 = vand.u32 %v148, 4294901760
  %150 = vmatmul.f32.gmra.mxu0 %v149
  %v151 = vpop.f32.mrf.mxu0
  %v152 = vadd.f32 %v125, %v151
  %153 = vdwg.mxu0
  %154 = vmatpush.msra.mxu0 0.0
  %155 = vmatpush.msra.mxu0 0.0
  %156 = vmatpush.msra.mxu0 0.0
  %157 = vmatpush.msra.mxu0 0.0
  %158 = vmatpush.msra.mxu0 0.0
  %159 = vmatpush.msra.mxu0 0.0
  %160 = vmatpush.msra.mxu0 0.0
  %161 = vmatpush.msra.mxu0 0.0
  %162 = vmatpush.msra.mxu0 0.0
  %163 = vmatpush.msra.mxu0 0.0
  %164 = vmatpush.msra.mxu0 0.0
  %165 = vmatpush.msra.mxu0 0.0
  %v166 = vand.u32 %v18, 4294901760
  %v167 = vsub.f32 %v18, %v166
  %v168 = vand.u32 %v167, 4294901760
  %169 = vmatpush.msra.mxu0 %v168
  %v170 = vand.u32 %v17, 4294901760
  %v171 = vsub.f32 %v17, %v170
  %v172 = vand.u32 %v171, 4294901760
  %173 = vmatpush.msra.mxu0 %v172
  %v174 = vand.u32 %v16, 4294901760
  %v175 = vsub.f32 %v16, %v174
  %v176 = vand.u32 %v175, 4294901760
  %177 = vmatpush.msra.mxu0 %v176
  %v178 = vand.u32 %v15, 4294901760
  %v179 = vsub.f32 %v15, %v178
  %v180 = vand.u32 %v179, 4294901760
  %181 = vmatpush.msra.mxu0 %v180
  %v182 = vand.u32 %v25, 4294901760
  %183 = vmatmul.f32.gmra.mxu0 %v182
  %v184 = vpop.f32.mrf.mxu0
  %v185 = vadd.f32 %v152, %v184
  %186 = vdwg.mxu0
  %187 = vmatpush.msra.mxu0 0.0
  %188 = vmatpush.msra.mxu0 0.0
  %189 = vmatpush.msra.mxu0 0.0
  %190 = vmatpush.msra.mxu0 0.0
  %191 = vmatpush.msra.mxu0 0.0
  %192 = vmatpush.msra.mxu0 0.0
  %193 = vmatpush.msra.mxu0 0.0
  %194 = vmatpush.msra.mxu0 0.0
  %195 = vmatpush.msra.mxu0 0.0
  %196 = vmatpush.msra.mxu0 0.0
  %197 = vmatpush.msra.mxu0 0.0
  %198 = vmatpush.msra.mxu0 0.0
  %v199 = vand.u32 %v18, 4294901760
  %200 = vmatpush.msra.mxu0 %v199
  %v201 = vand.u32 %v17, 4294901760
  %202 = vmatpush.msra.mxu0 %v201
  %v203 = vand.u32 %v16, 4294901760
  %204 = vmatpush.msra.mxu0 %v203
  %v205 = vand.u32 %v15, 4294901760
  %206 = vmatpush.msra.mxu0 %v205
  %v207 = vand.u32 %v25, 4294901760
  %208 = vmatmul.f32.gmra.mxu0 %v207
  %v209 = vpop.f32.mrf.mxu0
  %v210 = vadd.f32 %v185, %v209
  %211 = vdwg.mxu0
  %212 = vst [vmem:[%s3] sm:$0xff] %v210
  // Predicated region
  $region14: #{gating_network_forward.1} parent=0 // pred_check
    _
  $region15: #{gating_network_forward.1} parent=0 // pred_check_branch
    %214 = sbr.rel (0) target = $region17
  $region16: #{gating_network_forward.1} parent=0 // pred_region
    _
  $region17: #{gating_network_forward.1} parent=0 // pred_fallthru
    _
  // Predicated region
  $region18: #{gating_network_forward.1} parent=0 // pred_check
    _
  $region19: #{gating_network_forward.1} parent=0 // pred_check_branch
    %216 = sbr.rel (0) target = $region21
  $region20: #{gating_network_forward.1} parent=0 // pred_region
    _
  $region21: #{gating_network_forward.1} parent=0 // pred_fallthru
    _

</llo_original>
